<compile_context>
chip_gen: v7x
topology: tpu7x:2x2x1
jax: 0.10.0
libtpu: 0.0.40
codegen_flags: <defaults>
</compile_context>

<pallas_src>
import functools

import jax
import jax.numpy as jnp
from jax.experimental import pallas as pl
from jax.experimental.pallas import tpu as pltpu

HIDDEN = 256
N_CLS = 5
EMBD = 64
FUSED = 128            # lane-dense padded width for concat([pred(5), embd(64)])
OUT_W = 2 * FUSED      # both branches packed into one output slab


def _leaky_relu(h, slope=0.2):
    # nn.LeakyReLU(0.2); max form is one VALU op (valid for 0 < slope < 1).
    return jnp.maximum(h, slope * h)


def _round_up(n, m):
    return ((n + m - 1) // m) * m


def bow_model_kernel(
    s_ref, x_ref,
    w_bowh_ref, b_bowh_ref, w_bow2_ref, b_bow2_ref,
    w_beoh_ref, b_beoh_ref, w_beo2_ref, b_beo2_ref,
    out_ref,
    bow_h_acc,
):
    k = pl.program_id(1)
    nk = pl.num_programs(1)
    TB, L = s_ref.shape
    TV = w_bowh_ref.shape[0]

    # --- bag-of-words multi-hot for the current vocab slice -----------------
    # scatter of the constant 1 == OR over per-token one-hots (duplicates are
    # idempotent).  Bool accumulator, unrolled over the (small, static) L axis;
    # no (TB, L, V) intermediate is ever built.  Cast to bf16 exactly once.
    tok = s_ref[...]                                                  # (TB, L) i32
    base = k * TV
    vocab_iota = base + jax.lax.broadcasted_iota(jnp.int32, (TB, TV), 1)
    hot = tok[:, 0:1] == vocab_iota                                   # (TB, TV) bool
    for l in range(1, L):
        hot = jnp.logical_or(hot, tok[:, l:l + 1] == vocab_iota)
    bow = hot.astype(jnp.bfloat16)                                    # (TB, TV)

    # --- bow hidden layer, accumulated across vocab tiles --------------------
    @pl.when(k == 0)
    def _():
        bow_h_acc[...] = jnp.broadcast_to(b_bowh_ref[...], bow_h_acc.shape)

    bow_h_acc[...] += jnp.dot(bow, w_bowh_ref[...],
                              preferred_element_type=jnp.float32)

    # --- finalize: second layers + beo branch, single packed output ----------
    @pl.when(k == nk - 1)
    def _():
        bow_h = _leaky_relu(bow_h_acc[...])
        out_ref[:, :FUSED] = (
            jnp.dot(bow_h.astype(jnp.bfloat16), w_bow2_ref[...],
                    preferred_element_type=jnp.float32)
            + b_bow2_ref[...]
        )
        # (x - mean)/std already folded into w/b in the wrapper; K=32 f32 matmul
        # keeps raw-feature dynamic range exact.
        beo_h = _leaky_relu(
            jnp.dot(x_ref[...], w_beoh_ref[...],
                    preferred_element_type=jnp.float32)
            + b_beoh_ref[...]
        )
        out_ref[:, FUSED:] = (
            jnp.dot(beo_h.astype(jnp.bfloat16), w_beo2_ref[...],
                    preferred_element_type=jnp.float32)
            + b_beo2_ref[...]
        )


def init_params(key, vocab_size, beo_size, hidden=HIDDEN, embd=EMBD, n_cls=N_CLS):
    """PyTorch-style uniform(-1/sqrt(fan_in), 1/sqrt(fan_in)) init.
    Weights stored as (in_features, out_features)."""
    def linear(k, fan_in, fan_out):
        kw, kb = jax.random.split(k)
        bound = 1.0 / jnp.sqrt(fan_in)
        w = jax.random.uniform(kw, (fan_in, fan_out), jnp.float32, -bound, bound)
        b = jax.random.uniform(kb, (1, fan_out), jnp.float32, -bound, bound)
        return w, b

    keys = jax.random.split(key, 6)
    return {
        "bow_h": linear(keys[0], vocab_size, hidden),
        "bow_pred": linear(keys[1], hidden, n_cls),
        "bow_embd": linear(keys[2], hidden, embd),
        "beo_h": linear(keys[3], beo_size, hidden),
        "beo_pred": linear(keys[4], hidden, n_cls),
        "beo_embd": linear(keys[5], hidden, embd),
    }


def _vmem_limit_bytes(TB, L, TV, beo_size):
    # Weights + double-buffered per-tile inputs/outputs + scratch, with headroom.
    w_bow_block = 2 * TV * HIDDEN * 2                       # bf16, double-buffered
    w_rest = 2 * HIDDEN * FUSED * 2 + beo_size * HIDDEN * 4
    biases = (HIDDEN + 2 * FUSED) * 2 * 4
    tiles = 2 * (TB * L * 4 + TB * beo_size * 4 + TB * OUT_W * 4)
    scratch = TB * HIDDEN * 4
    total = w_bow_block + w_rest + biases + tiles + scratch
    total = total * 3 // 2 + (2 << 20)                      # 1.5x + 2 MiB headroom
    return int(min(max(total, 8 << 20), 64 << 20))          # stay under v7x per-TC VMEM


@jax.jit
def bow_model_forward(s, x, params, mean, std):
    B, L = s.shape
    beo_size = x.shape[1]
    vocab_size = params["bow_h"][0].shape[0]

    # --- fold (x - mean)/std into the first beo layer (scalar OR per-feature):
    #   ((x - mean)/std) @ W + b == x @ (W / std[:,None]) + (b - (mean/std) @ W)
    mean_v = jnp.broadcast_to(jnp.asarray(mean, jnp.float32), (beo_size,))
    std_v = jnp.broadcast_to(jnp.asarray(std, jnp.float32), (beo_size,))
    w_beoh, b_beoh = params["beo_h"]
    w_beoh_folded = (w_beoh / std_v[:, None]).astype(jnp.float32)      # (beo, 256) f32
    b_beoh_folded = b_beoh - (mean_v / std_v)[None, :] @ w_beoh        # (1, 256) f32

    # --- fuse pred(5) + embd(64) into a single lane-dense (HIDDEN, 128) matmul.
    def fuse(pred_wb, embd_wb):
        (wp, bp), (we, be) = pred_wb, embd_wb
        w = jnp.concatenate([wp, we], axis=1)              # (HIDDEN, 69)
        b = jnp.concatenate([bp, be], axis=1)              # (1, 69)
        pad = FUSED - w.shape[1]
        w = jnp.pad(w, ((0, 0), (0, pad)))
        b = jnp.pad(b, ((0, 0), (0, pad)))
        return w.astype(jnp.bfloat16), b                   # weight bf16, bias f32

    w_bow2, b_bow2 = fuse(params["bow_pred"], params["bow_embd"])
    w_beo2, b_beo2 = fuse(params["beo_pred"], params["beo_embd"])

    # --- vocab tiling of the (V, 256) bow weight (scales past VMEM limits).
    TV = min(_round_up(vocab_size, 128), 2048)
    V_pad = _round_up(vocab_size, TV)
    w_bowh = jnp.pad(params["bow_h"][0], ((0, V_pad - vocab_size), (0, 0)))
    w_bowh = w_bowh.astype(jnp.bfloat16)
    b_bowh = params["bow_h"][1]

    # --- batch tiling: sublane-aligned, up to 512 rows/tile, "parallel" axis.
    TB = min(512, _round_up(B, 8))
    B_pad = _round_up(B, TB)
    # NOTE: padded rows see token id 0 -> nonzero garbage bow rows; they are
    # sliced off below and must never be reduced over.
    s_p = jnp.pad(s.astype(jnp.int32), ((0, B_pad - B), (0, 0)))
    x_p = jnp.pad(x.astype(jnp.float32), ((0, B_pad - B), (0, 0)))

    vmem_full = pl.BlockSpec(memory_space=pltpu.MemorySpace.VMEM)

    out = pl.pallas_call(
        bow_model_kernel,
        out_shape=jax.ShapeDtypeStruct((B_pad, OUT_W), jnp.float32),
        grid=(B_pad // TB, V_pad // TV),
        in_specs=[
            pl.BlockSpec((TB, L), lambda i, k: (i, 0)),           # s
            pl.BlockSpec((TB, beo_size), lambda i, k: (i, 0)),    # x (f32)
            pl.BlockSpec((TV, HIDDEN), lambda i, k: (k, 0)),      # w_bowh vocab slice
            vmem_full, vmem_full, vmem_full,                      # b_bowh, w_bow2, b_bow2
            vmem_full, vmem_full, vmem_full, vmem_full,           # beo weights/biases
        ],
        out_specs=pl.BlockSpec((TB, OUT_W), lambda i, k: (i, 0)),
        scratch_shapes=[pltpu.VMEM((TB, HIDDEN), jnp.float32)],
        compiler_params=pltpu.CompilerParams(
            dimension_semantics=("parallel", "arbitrary"),
            vmem_limit_bytes=_vmem_limit_bytes(TB, L, TV, beo_size),
        ),
    )(s_p, x_p, w_bowh, b_bowh, w_bow2, b_bow2,
      w_beoh_folded, b_beoh_folded, w_beo2, b_beo2)

    # Slice the packed lane-dense output back into (pred, embd) per branch.
    bow_p = out[:B, :N_CLS]
    bow_e = out[:B, N_CLS:N_CLS + EMBD]
    beo_p = out[:B, FUSED:FUSED + N_CLS]
    beo_e = out[:B, FUSED + N_CLS:FUSED + N_CLS + EMBD]
    return bow_e, beo_e, bow_p, beo_p


def reference_forward(s, x, params, mean, std):
    """Pure-JAX f32 reference mirroring the PyTorch forward."""
    B = s.shape[0]
    vocab_size = params["bow_h"][0].shape[0]
    x = (x - mean) / std
    bow = jnp.zeros((B, vocab_size), jnp.float32)
    bow = bow.at[jnp.arange(B)[:, None], s].set(1.0)

    def lrelu(h):
        return jnp.where(h > 0, h, 0.2 * h)

    bow_h = lrelu(bow @ params["bow_h"][0] + params["bow_h"][1])
    beo_h = lrelu(x @ params["beo_h"][0] + params["beo_h"][1])
    bow_p = bow_h @ params["bow_pred"][0] + params["bow_pred"][1]
    beo_p = beo_h @ params["beo_pred"][0] + params["beo_pred"][1]
    bow_e = bow_h @ params["bow_embd"][0] + params["bow_embd"][1]
    beo_e = beo_h @ params["beo_embd"][0] + params["beo_embd"][1]
    return bow_e, beo_e, bow_p, beo_p


if __name__ == "__main__":
    # Small shapes consistent with the module's forward:
    #   s: (batch, seq) int token indices into vocab
    #   x: (batch, beo_size) float features
    batch, seq, vocab_size, beo_size = 8, 8, 128, 32
    mean, std = 0.5, 2.0

    key = jax.random.PRNGKey(0)
    k_p, k_s, k_x = jax.random.split(key, 3)

    params = init_params(k_p, vocab_size, beo_size)
    s = jax.random.randint(k_s, (batch, seq), 0, vocab_size, dtype=jnp.int32)
    x = jax.random.normal(k_x, (batch, beo_size), jnp.float32)

    outs = bow_model_forward(s, x, params, mean, std)
    outs = jax.block_until_ready(outs)

    refs = reference_forward(s, x, params, mean, std)
    for o, r in zip(outs, refs):
        assert o.shape == r.shape and o.dtype == r.dtype
        # bf16 MXU path with f32 accumulation -> loosened tolerance vs f32 ref.
        assert jnp.allclose(o, r, atol=3e-2, rtol=3e-2), "mismatch vs reference"

    print("KERNEL_OK")
</pallas_src>

<mosaic_0001>
module attributes {stable_mosaic.version = 11 : i64} {
  func.func @bow_model_kernel(%arg0: i32, %arg1: i32, %arg2: memref<8x8xi32, #tpu.memory_space<vmem>>, %arg3: memref<8x32xf32, #tpu.memory_space<vmem>>, %arg4: memref<128x256xbf16, #tpu.memory_space<vmem>>, %arg5: memref<1x256xf32, #tpu.memory_space<vmem>>, %arg6: memref<256x128xbf16, #tpu.memory_space<vmem>>, %arg7: memref<1x128xf32, #tpu.memory_space<vmem>>, %arg8: memref<32x256xf32, #tpu.memory_space<vmem>>, %arg9: memref<1x256xf32, #tpu.memory_space<vmem>>, %arg10: memref<256x128xbf16, #tpu.memory_space<vmem>>, %arg11: memref<1x128xf32, #tpu.memory_space<vmem>>, %arg12: memref<8x256xf32, #tpu.memory_space<vmem>>, %arg13: memref<8x256xf32, #tpu.memory_space<vmem>>) attributes {dimension_semantics = [#tpu.dimension_semantics<parallel>, #tpu.dimension_semantics<arbitrary>], iteration_bounds = array<i64: 1, 1>, scalar_prefetch = 0 : i64, scratch_operands = 1 : i64, tpu.core_type = #tpu.core_type<tc>, window_params = [{transform_indices = @transform_0, window_bounds = array<i64: 8, 8>}, {transform_indices = @transform_1, window_bounds = array<i64: 8, 32>}, {transform_indices = @transform_2, window_bounds = array<i64: 128, 256>}, {pipeline_mode = #tpu.pipeline_mode<synchronous>, transform_indices = @transform_3, window_bounds = array<i64: 1, 256>}, {pipeline_mode = #tpu.pipeline_mode<synchronous>, transform_indices = @transform_4, window_bounds = array<i64: 256, 128>}, {pipeline_mode = #tpu.pipeline_mode<synchronous>, transform_indices = @transform_5, window_bounds = array<i64: 1, 128>}, {pipeline_mode = #tpu.pipeline_mode<synchronous>, transform_indices = @transform_6, window_bounds = array<i64: 32, 256>}, {pipeline_mode = #tpu.pipeline_mode<synchronous>, transform_indices = @transform_7, window_bounds = array<i64: 1, 256>}, {pipeline_mode = #tpu.pipeline_mode<synchronous>, transform_indices = @transform_8, window_bounds = array<i64: 256, 128>}, {pipeline_mode = #tpu.pipeline_mode<synchronous>, transform_indices = @transform_9, window_bounds = array<i64: 1, 128>}, {transform_indices = @transform_10, window_bounds = array<i64: 8, 256>}]} {
    %c0 = arith.constant 0 : index
    %c0_0 = arith.constant 0 : index
    %0 = vector.load %arg2[%c0, %c0_0] : memref<8x8xi32, #tpu.memory_space<vmem>>, vector<8x8xi32>
    %c128_i32 = arith.constant 128 : i32
    %1 = arith.muli %arg1, %c128_i32 : i32
    %2 = tpu.iota {dimensions = array<i32: 1>} : vector<8x128xi32>
    %3 = vector.broadcast %1 : i32 to vector<8x128xi32>
    %4 = arith.addi %3, %2 : vector<8x128xi32>
    %5 = vector.extract_strided_slice %0 {offsets = [0, 0], sizes = [8, 1], strides = [1, 1]} : vector<8x8xi32> to vector<8x1xi32>
    %6 = vector.broadcast %5 : vector<8x1xi32> to vector<8x128xi32>
    %7 = arith.cmpi eq, %6, %4 : vector<8x128xi32>
    %8 = vector.extract_strided_slice %0 {offsets = [0, 1], sizes = [8, 1], strides = [1, 1]} : vector<8x8xi32> to vector<8x1xi32>
    %9 = vector.broadcast %8 : vector<8x1xi32> to vector<8x128xi32>
    %10 = arith.cmpi eq, %9, %4 : vector<8x128xi32>
    %11 = arith.ori %7, %10 : vector<8x128xi1>
    %12 = vector.extract_strided_slice %0 {offsets = [0, 2], sizes = [8, 1], strides = [1, 1]} : vector<8x8xi32> to vector<8x1xi32>
    %13 = vector.broadcast %12 : vector<8x1xi32> to vector<8x128xi32>
    %14 = arith.cmpi eq, %13, %4 : vector<8x128xi32>
    %15 = arith.ori %11, %14 : vector<8x128xi1>
    %16 = vector.extract_strided_slice %0 {offsets = [0, 3], sizes = [8, 1], strides = [1, 1]} : vector<8x8xi32> to vector<8x1xi32>
    %17 = vector.broadcast %16 : vector<8x1xi32> to vector<8x128xi32>
    %18 = arith.cmpi eq, %17, %4 : vector<8x128xi32>
    %19 = arith.ori %15, %18 : vector<8x128xi1>
    %20 = vector.extract_strided_slice %0 {offsets = [0, 4], sizes = [8, 1], strides = [1, 1]} : vector<8x8xi32> to vector<8x1xi32>
    %21 = vector.broadcast %20 : vector<8x1xi32> to vector<8x128xi32>
    %22 = arith.cmpi eq, %21, %4 : vector<8x128xi32>
    %23 = arith.ori %19, %22 : vector<8x128xi1>
    %24 = vector.extract_strided_slice %0 {offsets = [0, 5], sizes = [8, 1], strides = [1, 1]} : vector<8x8xi32> to vector<8x1xi32>
    %25 = vector.broadcast %24 : vector<8x1xi32> to vector<8x128xi32>
    %26 = arith.cmpi eq, %25, %4 : vector<8x128xi32>
    %27 = arith.ori %23, %26 : vector<8x128xi1>
    %28 = vector.extract_strided_slice %0 {offsets = [0, 6], sizes = [8, 1], strides = [1, 1]} : vector<8x8xi32> to vector<8x1xi32>
    %29 = vector.broadcast %28 : vector<8x1xi32> to vector<8x128xi32>
    %30 = arith.cmpi eq, %29, %4 : vector<8x128xi32>
    %31 = arith.ori %27, %30 : vector<8x128xi1>
    %32 = vector.extract_strided_slice %0 {offsets = [0, 7], sizes = [8, 1], strides = [1, 1]} : vector<8x8xi32> to vector<8x1xi32>
    %33 = vector.broadcast %32 : vector<8x1xi32> to vector<8x128xi32>
    %34 = arith.cmpi eq, %33, %4 : vector<8x128xi32>
    %35 = arith.ori %31, %34 : vector<8x128xi1>
    %36 = arith.extui %35 : vector<8x128xi1> to vector<8x128xi32>
    %37 = arith.sitofp %36 : vector<8x128xi32> to vector<8x128xf32>
    %38 = arith.truncf %37 : vector<8x128xf32> to vector<8x128xbf16>
    %c0_i32 = arith.constant 0 : i32
    %39 = arith.cmpi eq, %arg1, %c0_i32 : i32
    %40 = arith.extui %39 : i1 to i32
    %c0_i32_1 = arith.constant 0 : i32
    %41 = arith.cmpi ne, %40, %c0_i32_1 : i32
    scf.if %41 {
      %c0_10 = arith.constant 0 : index
      %c0_11 = arith.constant 0 : index
      %50 = vector.load %arg5[%c0_10, %c0_11] : memref<1x256xf32, #tpu.memory_space<vmem>>, vector<1x256xf32>
      %51 = vector.shape_cast %50 : vector<1x256xf32> to vector<1x256xf32>
      %52 = vector.broadcast %51 : vector<1x256xf32> to vector<8x256xf32>
      %c0_12 = arith.constant 0 : index
      %c0_13 = arith.constant 0 : index
      %53 = vector.load %arg13[%c0_12, %c0_13] : memref<8x256xf32, #tpu.memory_space<vmem>>, vector<8x256xf32>
      tpu.vector_store %arg13[%c0_12, %c0_13], %52 {strides = array<i32>} : memref<8x256xf32, #tpu.memory_space<vmem>>, vector<8x256xf32>,
    } else {
    }
    %c0_2 = arith.constant 0 : index
    %c0_3 = arith.constant 0 : index
    %42 = vector.load %arg13[%c0_2, %c0_3] : memref<8x256xf32, #tpu.memory_space<vmem>>, vector<8x256xf32>
    %c0_4 = arith.constant 0 : index
    %c0_5 = arith.constant 0 : index
    %43 = vector.load %arg4[%c0_4, %c0_5] : memref<128x256xbf16, #tpu.memory_space<vmem>>, vector<128x256xbf16>
    %cst = arith.constant dense<0.000000e+00> : vector<8x256xf32>
    %44 = tpu.matmul %38, %43, %cst {dimension_numbers = #tpu.dot_dimension_numbers<[1], [0], [0], [1], [0, 0, 1, 1], [], []>} : vector<8x128xbf16>, vector<128x256xbf16>, vector<8x256xf32> -> vector<8x256xf32>
    %45 = arith.addf %42, %44 : vector<8x256xf32>
    %c0_6 = arith.constant 0 : index
    %c0_7 = arith.constant 0 : index
    %46 = vector.load %arg13[%c0_6, %c0_7] : memref<8x256xf32, #tpu.memory_space<vmem>>, vector<8x256xf32>
    tpu.vector_store %arg13[%c0_6, %c0_7], %45 {strides = array<i32>} : memref<8x256xf32, #tpu.memory_space<vmem>>, vector<8x256xf32>,
    %c0_i32_8 = arith.constant 0 : i32
    %47 = arith.cmpi eq, %arg1, %c0_i32_8 : i32
    %48 = arith.extui %47 : i1 to i32
    %c0_i32_9 = arith.constant 0 : i32
    %49 = arith.cmpi ne, %48, %c0_i32_9 : i32
    scf.if %49 {
      %c0_10 = arith.constant 0 : index
      %c0_11 = arith.constant 0 : index
      %50 = vector.load %arg13[%c0_10, %c0_11] : memref<8x256xf32, #tpu.memory_space<vmem>>, vector<8x256xf32>
      %cst_12 = arith.constant 2.000000e-01 : f32
      %51 = vector.broadcast %cst_12 : f32 to vector<8x256xf32>
      %52 = arith.mulf %51, %50 : vector<8x256xf32>
      %53 = arith.maximumf %50, %52 : vector<8x256xf32>
      %54 = arith.truncf %53 : vector<8x256xf32> to vector<8x256xbf16>
      %c0_13 = arith.constant 0 : index
      %c0_14 = arith.constant 0 : index
      %55 = vector.load %arg6[%c0_13, %c0_14] : memref<256x128xbf16, #tpu.memory_space<vmem>>, vector<256x128xbf16>
      %cst_15 = arith.constant dense<0.000000e+00> : vector<8x128xf32>
      %56 = tpu.matmul %54, %55, %cst_15 {dimension_numbers = #tpu.dot_dimension_numbers<[1], [0], [0], [1], [0, 0, 1, 1], [], []>} : vector<8x256xbf16>, vector<256x128xbf16>, vector<8x128xf32> -> vector<8x128xf32>
      %c0_16 = arith.constant 0 : index
      %c0_17 = arith.constant 0 : index
      %57 = vector.load %arg7[%c0_16, %c0_17] : memref<1x128xf32, #tpu.memory_space<vmem>>, vector<1x128xf32>
      %58 = vector.broadcast %57 : vector<1x128xf32> to vector<8x128xf32>
      %59 = arith.addf %56, %58 : vector<8x128xf32>
      %c0_18 = arith.constant 0 : index
      %c0_19 = arith.constant 0 : index
      %60 = vector.load %arg12[%c0_18, %c0_19] : memref<8x256xf32, #tpu.memory_space<vmem>>, vector<8x128xf32>
      tpu.vector_store %arg12[%c0_18, %c0_19], %59 {strides = array<i32>} : memref<8x256xf32, #tpu.memory_space<vmem>>, vector<8x128xf32>,
      %c0_20 = arith.constant 0 : index
      %c0_21 = arith.constant 0 : index
      %61 = vector.load %arg3[%c0_20, %c0_21] : memref<8x32xf32, #tpu.memory_space<vmem>>, vector<8x32xf32>
      %c0_22 = arith.constant 0 : index
      %c0_23 = arith.constant 0 : index
      %62 = vector.load %arg8[%c0_22, %c0_23] : memref<32x256xf32, #tpu.memory_space<vmem>>, vector<32x256xf32>
      %cst_24 = arith.constant dense<0.000000e+00> : vector<8x256xf32>
      %63 = tpu.matmul %61, %62, %cst_24 {dimension_numbers = #tpu.dot_dimension_numbers<[1], [0], [0], [1], [0, 0, 1, 1], [], []>} : vector<8x32xf32>, vector<32x256xf32>, vector<8x256xf32> -> vector<8x256xf32>
      %c0_25 = arith.constant 0 : index
      %c0_26 = arith.constant 0 : index
      %64 = vector.load %arg9[%c0_25, %c0_26] : memref<1x256xf32, #tpu.memory_space<vmem>>, vector<1x256xf32>
      %65 = vector.broadcast %64 : vector<1x256xf32> to vector<8x256xf32>
      %66 = arith.addf %63, %65 : vector<8x256xf32>
      %cst_27 = arith.constant 2.000000e-01 : f32
      %67 = vector.broadcast %cst_27 : f32 to vector<8x256xf32>
      %68 = arith.mulf %67, %66 : vector<8x256xf32>
      %69 = arith.maximumf %66, %68 : vector<8x256xf32>
      %70 = arith.truncf %69 : vector<8x256xf32> to vector<8x256xbf16>
      %c0_28 = arith.constant 0 : index
      %c0_29 = arith.constant 0 : index
      %71 = vector.load %arg10[%c0_28, %c0_29] : memref<256x128xbf16, #tpu.memory_space<vmem>>, vector<256x128xbf16>
      %cst_30 = arith.constant dense<0.000000e+00> : vector<8x128xf32>
      %72 = tpu.matmul %70, %71, %cst_30 {dimension_numbers = #tpu.dot_dimension_numbers<[1], [0], [0], [1], [0, 0, 1, 1], [], []>} : vector<8x256xbf16>, vector<256x128xbf16>, vector<8x128xf32> -> vector<8x128xf32>
      %c0_31 = arith.constant 0 : index
      %c0_32 = arith.constant 0 : index
      %73 = vector.load %arg11[%c0_31, %c0_32] : memref<1x128xf32, #tpu.memory_space<vmem>>, vector<1x128xf32>
      %74 = vector.broadcast %73 : vector<1x128xf32> to vector<8x128xf32>
      %75 = arith.addf %72, %74 : vector<8x128xf32>
      %c0_33 = arith.constant 0 : index
      %c128 = arith.constant 128 : index
      %76 = vector.load %arg12[%c0_33, %c128] : memref<8x256xf32, #tpu.memory_space<vmem>>, vector<8x128xf32>
      tpu.vector_store %arg12[%c0_33, %c128], %75 {strides = array<i32>} : memref<8x256xf32, #tpu.memory_space<vmem>>, vector<8x128xf32>,
    } else {
    }
    return
  }
  func.func @transform_0(%arg0: i32, %arg1: i32) -> (i32, i32) {
    %c0_i32 = arith.constant 0 : i32
    %c0_i32_0 = arith.constant 0 : i32
    return %arg0, %c0_i32 : i32, i32
  }
  func.func @transform_1(%arg0: i32, %arg1: i32) -> (i32, i32) {
    %c0_i32 = arith.constant 0 : i32
    %c0_i32_0 = arith.constant 0 : i32
    return %arg0, %c0_i32 : i32, i32
  }
  func.func @transform_2(%arg0: i32, %arg1: i32) -> (i32, i32) {
    %c0_i32 = arith.constant 0 : i32
    %c0_i32_0 = arith.constant 0 : i32
    return %arg1, %c0_i32 : i32, i32
  }
  func.func @transform_3(%arg0: i32, %arg1: i32) -> (i32, i32) {
    %c0_i32 = arith.constant 0 : i32
    %c0_i32_0 = arith.constant 0 : i32
    %c0_i32_1 = arith.constant 0 : i32
    return %c0_i32, %c0_i32_0 : i32, i32
  }
  func.func @transform_4(%arg0: i32, %arg1: i32) -> (i32, i32) {
    %c0_i32 = arith.constant 0 : i32
    %c0_i32_0 = arith.constant 0 : i32
    %c0_i32_1 = arith.constant 0 : i32
    return %c0_i32, %c0_i32_0 : i32, i32
  }
  func.func @transform_5(%arg0: i32, %arg1: i32) -> (i32, i32) {
    %c0_i32 = arith.constant 0 : i32
    %c0_i32_0 = arith.constant 0 : i32
    %c0_i32_1 = arith.constant 0 : i32
    return %c0_i32, %c0_i32_0 : i32, i32
  }
  func.func @transform_6(%arg0: i32, %arg1: i32) -> (i32, i32) {
    %c0_i32 = arith.constant 0 : i32
    %c0_i32_0 = arith.constant 0 : i32
    %c0_i32_1 = arith.constant 0 : i32
    return %c0_i32, %c0_i32_0 : i32, i32
  }
  func.func @transform_7(%arg0: i32, %arg1: i32) -> (i32, i32) {
    %c0_i32 = arith.constant 0 : i32
    %c0_i32_0 = arith.constant 0 : i32
    %c0_i32_1 = arith.constant 0 : i32
    return %c0_i32, %c0_i32_0 : i32, i32
  }
  func.func @transform_8(%arg0: i32, %arg1: i32) -> (i32, i32) {
    %c0_i32 = arith.constant 0 : i32
    %c0_i32_0 = arith.constant 0 : i32
    %c0_i32_1 = arith.constant 0 : i32
    return %c0_i32, %c0_i32_0 : i32, i32
  }
  func.func @transform_9(%arg0: i32, %arg1: i32) -> (i32, i32) {
    %c0_i32 = arith.constant 0 : i32
    %c0_i32_0 = arith.constant 0 : i32
    %c0_i32_1 = arith.constant 0 : i32
    return %c0_i32, %c0_i32_0 : i32, i32
  }
  func.func @transform_10(%arg0: i32, %arg1: i32) -> (i32, i32) {
    %c0_i32 = arith.constant 0 : i32
    %c0_i32_0 = arith.constant 0 : i32
    return %arg0, %c0_i32 : i32, i32
  }
}

</mosaic_0001>

<llo_original>
// kernel: sub.1
$region0: #{sub.1}
  #allocation0 [shape = 's32[1]{0}', space=sflag, size = 0x4, scoped, tag = 'scoped memory for sub.1']
  %s0 = inlined_call_operand.vmem [shape: f32[1,256], index: 0, kind: input, shape index: {}]
  %s1 = inlined_call_operand.vmem [shape: f32[1,256], index: 1, kind: input, shape index: {}]
  %s2 = inlined_call_operand.vmem [shape: f32[1,256], index: 2, kind: output, shape index: {}]
  %v3 = vld [vmem:[%s0] sm:$0x1]
  %v4 = vld [vmem:[%s1] sm:$0x1]
  %5 = xla_tuple %v3, %v4
  %6 = xla_tuple %5
  %v7 = vsub.f32 %v3, %v4
  %8 = xla_tuple %v7
  %9 = vst [vmem:[%s2] sm:$0x1] %v7
  %s10 = scalar_lea.vmem %s0, 1
  %v11 = vld [vmem:[%s10] sm:$0x1]
  %s12 = scalar_lea.vmem %s1, 1
  %v13 = vld [vmem:[%s12] sm:$0x1]
  %14 = xla_tuple %v11, %v13
  %15 = xla_tuple %14
  %v16 = vsub.f32 %v11, %v13
  %17 = xla_tuple %v16
  %s18 = scalar_lea.vmem %s2, 1
  %19 = vst [vmem:[%s18] sm:$0x1] %v16

// kernel: bow_model_forward.1
$region0: #{bow_model_forward.1}
  #allocation0 [shape = 'u32[]', space=smem, size = 0x4, offset = 0x4, fixed_abs, tag = 'smem constant byte address 0x4 - core index']
  #allocation1 [shape = 'u32[144,128]{1,0:T(1,128)}', space=vmem, size = 0x12000, scoped, tag = 'internal scratch']
  #allocation2 [shape = 'f32[8,256]{1,0:T(8,128)}', space=vmem, size = 0x2000, scoped, tag = 'scratch operand']
  %s0 = inlined_call_operand.vmem [shape: s32[8,8], index: 0, kind: input, shape index: {}]
  %s1 = inlined_call_operand.vmem [shape: f32[8,32], index: 1, kind: input, shape index: {}]
  %s2 = inlined_call_operand.vmem [shape: bf16[128,256], index: 2, kind: input, shape index: {}]
  %s3 = inlined_call_operand.vmem [shape: f32[1,256], index: 3, kind: input, shape index: {}]
  %s4 = inlined_call_operand.vmem [shape: bf16[256,128], index: 4, kind: input, shape index: {}]
  %s5 = inlined_call_operand.vmem [shape: f32[1,128], index: 5, kind: input, shape index: {}]
  %s6 = inlined_call_operand.vmem [shape: f32[32,256], index: 6, kind: input, shape index: {}]
  %s7 = inlined_call_operand.vmem [shape: f32[1,256], index: 7, kind: input, shape index: {}]
  %s8 = inlined_call_operand.vmem [shape: bf16[256,128], index: 8, kind: input, shape index: {}]
  %s9 = inlined_call_operand.vmem [shape: f32[1,128], index: 9, kind: input, shape index: {}]
  %s10 = inlined_call_operand.vmem [shape: f32[8,256], index: 10, kind: output, shape index: {}]
  %s11 = sld [smem:[#allocation0]]
  $region58: #{bow_model_forward.1} parent=0
    _
  %s13 = ssub.s32 1, %s11
  %s14 = scalar_select 0, %s13, %s11
  // Predicated region
  $region2: #{bow_model_forward.1} parent=0 // pred_check
    _
  $region3: #{bow_model_forward.1} parent=0 // pred_check_branch
    %16 = sbr.rel (0) target = $region5
  $region4: #{bow_model_forward.1} parent=0 // pred_region
    _
  $region5: #{bow_model_forward.1} parent=0 // pred_fallthru
    _
  // Predicated region
  $region6: #{bow_model_forward.1} parent=0 // pred_check
    _
  $region7: #{bow_model_forward.1} parent=0 // pred_check_branch
    %18 = sbr.rel (0) target = $region9
  $region8: #{bow_model_forward.1} parent=0 // pred_region
    _
  $region9: #{bow_model_forward.1} parent=0 // pred_fallthru
    _
  // Predicated region
  $region10: #{bow_model_forward.1} parent=0 // pred_check
    _
  $region11: #{bow_model_forward.1} parent=0 // pred_check_branch
    %20 = sbr.rel (0) target = $region13
  $region12: #{bow_model_forward.1} parent=0 // pred_region
    _
  $region13: #{bow_model_forward.1} parent=0 // pred_fallthru
    _
  // Predicated region
  $region14: #{bow_model_forward.1} parent=0 // pred_check
    _
  $region15: #{bow_model_forward.1} parent=0 // pred_check_branch
    %22 = sbr.rel (0) target = $region17
  $region16: #{bow_model_forward.1} parent=0 // pred_region
    _
  $region17: #{bow_model_forward.1} parent=0 // pred_fallthru
    _
  // Predicated region
  $region18: #{bow_model_forward.1} parent=0 // pred_check
    _
  $region19: #{bow_model_forward.1} parent=0 // pred_check_branch
    %24 = sbr.rel (0) target = $region21
  $region20: #{bow_model_forward.1} parent=0 // pred_region
    _
  $region21: #{bow_model_forward.1} parent=0 // pred_fallthru
    _
  // Predicated region
  $region22: #{bow_model_forward.1} parent=0 // pred_check
    _
  $region23: #{bow_model_forward.1} parent=0 // pred_check_branch
    %26 = sbr.rel (0) target = $region25
  $region24: #{bow_model_forward.1} parent=0 // pred_region
    _
  $region25: #{bow_model_forward.1} parent=0 // pred_fallthru
    _
  // Predicated region
  $region26: #{bow_model_forward.1} parent=0 // pred_check
    _
  $region27: #{bow_model_forward.1} parent=0 // pred_check_branch
    %28 = sbr.rel (0) target = $region29
  $region28: #{bow_model_forward.1} parent=0 // pred_region
    _
  $region29: #{bow_model_forward.1} parent=0 // pred_fallthru
    _
  // Predicated region
  $region30: #{bow_model_forward.1} parent=0 // pred_check
    _
  $region31: #{bow_model_forward.1} parent=0 // pred_check_branch
    %30 = sbr.rel (0) target = $region33
  $region32: #{bow_model_forward.1} parent=0 // pred_region
    _
  $region33: #{bow_model_forward.1} parent=0 // pred_fallthru
    _
  // Predicated region
  $region34: #{bow_model_forward.1} parent=0 // pred_check
    _
  $region35: #{bow_model_forward.1} parent=0 // pred_check_branch
    %32 = sbr.rel (0) target = $region37
  $region36: #{bow_model_forward.1} parent=0 // pred_region
    _
  $region37: #{bow_model_forward.1} parent=0 // pred_fallthru
    _
  // Predicated region
  $region38: #{bow_model_forward.1} parent=0 // pred_check
    _
  $region39: #{bow_model_forward.1} parent=0 // pred_check_branch
    %34 = sbr.rel (0) target = $region41
  $region40: #{bow_model_forward.1} parent=0 // pred_region
    _
  $region41: #{bow_model_forward.1} parent=0 // pred_fallthru
    _
  %v36 = vld [vmem:[%s0] sm:$0xff]
  %s37 = smul.u32 0, 128
  %v38 = vlaneseq
  %v39 = vand.u32 %v38, 127
  %v40 = vstv %s37
  %v41 = vadd.s32 %v40, %v39
  %42 = vset.pattern.permute.xlu0 0
  %43 = vperm.xlu0 %42, %v36
  %v44 = vpop.permute.xlu0 %43
  %vm45 = vcmp.eq.s32.totalorder %v44, %v41
  %46 = vset.pattern.permute.xlu0 1
  %47 = vperm.xlu0 %46, %v36
  %v48 = vpop.permute.xlu0 %47
  %vm49 = vcmp.eq.s32.totalorder %v48, %v41
  %vm50 = vmor %vm45, %vm49
  %51 = vset.pattern.permute.xlu0 2
  %52 = vperm.xlu0 %51, %v36
  %v53 = vpop.permute.xlu0 %52
  %vm54 = vcmp.eq.s32.totalorder %v53, %v41
  %vm55 = vmor %vm50, %vm54
  %56 = vset.pattern.permute.xlu0 3
  %57 = vperm.xlu0 %56, %v36
  %v58 = vpop.permute.xlu0 %57
  %vm59 = vcmp.eq.s32.totalorder %v58, %v41
  %vm60 = vmor %vm55, %vm59
  %61 = vset.pattern.permute.xlu0 4
  %62 = vperm.xlu0 %61, %v36
  %v63 = vpop.permute.xlu0 %62
  %vm64 = vcmp.eq.s32.totalorder %v63, %v41
  %vm65 = vmor %vm60, %vm64
  %66 = vset.pattern.permute.xlu0 5
  %67 = vperm.xlu0 %66, %v36
  %v68 = vpop.permute.xlu0 %67
  %vm69 = vcmp.eq.s32.totalorder %v68, %v41
  %vm70 = vmor %vm65, %vm69
  %71 = vset.pattern.permute.xlu0 6
  %72 = vperm.xlu0 %71, %v36
  %v73 = vpop.permute.xlu0 %72
  %vm74 = vcmp.eq.s32.totalorder %v73, %v41
  %vm75 = vmor %vm70, %vm74
  %76 = vset.pattern.permute.xlu0 7
  %77 = vperm.xlu0 %76, %v36
  %v78 = vpop.permute.xlu0 %77
  %vm79 = vcmp.eq.s32.totalorder %v78, %v41
  %vm80 = vmor %vm75, %vm79
  %v81 = vsel %vm80, 1, 0
  %v82 = vcvt.s32.f32 %v81
  %v83 = vpack.c.bf16 %v82, %v82
  %p84 = scmp.eq.s32.totalorder 0, 0
  // Predicated region
  $region42: #{bow_model_forward.1} parent=0 // pred_check
    %p85 = pneg %p84
  $region43: #{bow_model_forward.1} parent=0 // pred_check_branch
    %87 = sbr.rel (%p85) target = $region45
  $region44: #{bow_model_forward.1} parent=0 // pred_region
    %v88 = vld [vmem:[%s3] sm:$0x3]
    %v90 = vlaneseq
    %v91 = vshrl.u32 %v90, 7
    %v92 = vsub.s32 0, %v91
    %v93 = vrot.slane %v88, %v92
    %v94 = vlaneseq
    %v95 = vshrl.u32 %v94, 7
    %v96 = vsub.s32 1, %v95
    %v97 = vrot.slane %v88, %v96
    %100 = vst [vmem:[#allocation2] sm:$0xff] %v93
    %101 = vst [vmem:[#allocation2 + $0x8] sm:$0xff] %v97
  $region45: #{bow_model_forward.1} parent=0 // pred_fallthru
    _
  %v102 = vld [vmem:[#allocation2] sm:$0xff]
  %v103 = vld [vmem:[#allocation2 + $0x8] sm:$0xff]
  %v104 = vld [vmem:[%s2] sm:$0xff]
  %v105 = vld [vmem:[%s2 + $0x8] sm:$0xff]
  %v106 = vld [vmem:[%s2 + $0x10] sm:$0xff]
  %v107 = vld [vmem:[%s2 + $0x18] sm:$0xff]
  %v108 = vld [vmem:[%s2 + $0x20] sm:$0xff]
  %v109 = vld [vmem:[%s2 + $0x28] sm:$0xff]
  %v110 = vld [vmem:[%s2 + $0x30] sm:$0xff]
  %v111 = vld [vmem:[%s2 + $0x38] sm:$0xff]
  %v112 = vld [vmem:[%s2 + $0x40] sm:$0xff]
  %v113 = vld [vmem:[%s2 + $0x48] sm:$0xff]
  %v114 = vld [vmem:[%s2 + $0x50] sm:$0xff]
  %v115 = vld [vmem:[%s2 + $0x58] sm:$0xff]
  %v116 = vld [vmem:[%s2 + $0x60] sm:$0xff]
  %v117 = vld [vmem:[%s2 + $0x68] sm:$0xff]
  %v118 = vld [vmem:[%s2 + $0x70] sm:$0xff]
  %v119 = vld [vmem:[%s2 + $0x78] sm:$0xff]
  %v136 = vunpack.c.l.b16 %v104
  %v137 = vunpack.c.h.b16 %v104
  %v138 = vunpack.c.l.b16 %v105
  %v139 = vunpack.c.h.b16 %v105
  %v140 = vunpack.c.l.b16 %v106
  %v141 = vunpack.c.h.b16 %v106
  %v142 = vunpack.c.l.b16 %v107
  %v143 = vunpack.c.h.b16 %v107
  %v144 = vunpack.c.l.b16 %v108
  %v145 = vunpack.c.h.b16 %v108
  %v146 = vunpack.c.l.b16 %v109
  %v147 = vunpack.c.h.b16 %v109
  %v148 = vunpack.c.l.b16 %v110
  %v149 = vunpack.c.h.b16 %v110
  %v150 = vunpack.c.l.b16 %v111
  %v151 = vunpack.c.h.b16 %v111
  %v152 = vunpack.c.l.b16 %v112
  %v153 = vunpack.c.h.b16 %v112
  %v154 = vunpack.c.l.b16 %v113
  %v155 = vunpack.c.h.b16 %v113
  %v156 = vunpack.c.l.b16 %v114
  %v157 = vunpack.c.h.b16 %v114
  %v158 = vunpack.c.l.b16 %v115
  %v159 = vunpack.c.h.b16 %v115
  %v160 = vunpack.c.l.b16 %v116
  %v161 = vunpack.c.h.b16 %v116
  %v162 = vunpack.c.l.b16 %v117
  %v163 = vunpack.c.h.b16 %v117
  %v164 = vunpack.c.l.b16 %v118
  %v165 = vunpack.c.h.b16 %v118
  %v166 = vunpack.c.l.b16 %v119
  %v167 = vunpack.c.h.b16 %v119
  %v168 = vpack.c.b16 %v138, %v136
  %v169 = vpack.c.b16 %v139, %v137
  %v170 = vpack.c.b16 %v142, %v140
  %v171 = vpack.c.b16 %v143, %v141
  %v172 = vpack.c.b16 %v146, %v144
  %v173 = vpack.c.b16 %v147, %v145
  %v174 = vpack.c.b16 %v150, %v148
  %v175 = vpack.c.b16 %v151, %v149
  %v176 = vpack.c.b16 %v154, %v152
  %v177 = vpack.c.b16 %v155, %v153
  %v178 = vpack.c.b16 %v158, %v156
  %v179 = vpack.c.b16 %v159, %v157
  %v180 = vpack.c.b16 %v162, %v160
  %v181 = vpack.c.b16 %v163, %v161
  %v182 = vpack.c.b16 %v166, %v164
  %v183 = vpack.c.b16 %v167, %v165
  %200 = vmatprep.subr.bf16.mxu0 %v169
  %201 = vmatpush1.bf16.msra.mxu0 %v168
  %202 = vmatprep.subr.bf16.mxu0 %v171
  %203 = vmatpush1.bf16.msra.mxu0 %v170
  %204 = vmatprep.subr.bf16.mxu0 %v173
  %205 = vmatpush1.bf16.msra.mxu0 %v172
  %206 = vmatprep.subr.bf16.mxu0 %v175
  %207 = vmatpush1.bf16.msra.mxu0 %v174
  %208 = vmatprep.subr.bf16.mxu0 %v177
  %209 = vmatpush1.bf16.msra.mxu0 %v176
  %210 = vmatprep.subr.bf16.mxu0 %v179
  %211 = vmatpush1.bf16.msra.mxu0 %v178
  %212 = vmatprep.subr.bf16.mxu0 %v181
  %213 = vmatpush1.bf16.msra.mxu0 %v180
  %214 = vmatprep.subr.bf16.mxu0 %v183
  %215 = vmatpush1.bf16.msra.mxu0 %v182
  %216 = vmatprep.subr.bf16.mxu0 0
  %217 = vmatpush1.bf16.msra.mxu0 0
  %218 = vmatprep.subr.bf16.mxu0 0
  %219 = vmatpush1.bf16.msra.mxu0 0
  %220 = vmatprep.subr.bf16.mxu0 0
  %221 = vmatpush1.bf16.msra.mxu0 0
  %222 = vmatprep.subr.bf16.mxu0 0
  %223 = vmatpush1.bf16.msra.mxu0 0
  %224 = vmatprep.subr.bf16.mxu0 0
  %225 = vmatpush1.bf16.msra.mxu0 0
  %226 = vmatprep.subr.bf16.mxu0 0
  %227 = vmatpush1.bf16.msra.mxu0 0
  %228 = vmatprep.subr.bf16.mxu0 0
  %229 = vmatpush1.bf16.msra.mxu0 0
  %230 = vmatprep.subr.bf16.mxu0 0
  %231 = vmatpush1.bf16.msra.mxu0 0
  %232 = vmatprep.mubr.bf16.mxu0 0
  %233 = vmatmul.mubr.bf16.gmra.mrb[0].mxu0 %v83
  %v234 = vpop.f32.mrb[0].mxu0
  %v235 = vadd.f32 0.0, %v234
  %v236 = vpop.f32.mrb[0].mxu0
  %v237 = vadd.f32 0.0, %v236
  %v238 = vpop.f32.mrb[0].mxu0
  %v239 = vpop.f32.mrb[0].mxu0
  %240 = vdwg.mxu0
  %v241 = vadd.f32 %v102, %v235
  %v242 = vadd.f32 %v103, %v237
  %243 = vst [vmem:[#allocation2] sm:$0xff] %v241
  %244 = vst [vmem:[#allocation2 + $0x8] sm:$0xff] %v242
  // Predicated region
  $region46: #{bow_model_forward.1} parent=0 // pred_check
    %p245 = pneg %p84
  $region47: #{bow_model_forward.1} parent=0 // pred_check_branch
    %247 = sbr.rel (%p245) target = $region49
  $region48: #{bow_model_forward.1} parent=0 // pred_region
    %v248 = vld [vmem:[#allocation2] sm:$0xff]
    %v249 = vld [vmem:[#allocation2 + $0x8] sm:$0xff]
    %v250 = vmul.f32 %v248, 0.2
    %v251 = vmul.f32 %v249, 0.2
    %v252 = vmax.f32 %v248, %v250
    %v253 = vmax.f32 %v249, %v251
    %v254 = vpack.c.bf16 %v252, %v252
    %v255 = vpack.c.bf16 %v253, %v253
    %v256 = vld [vmem:[%s4] sm:$0xf]
    %v257 = vld [vmem:[%s4 + $0x4] sm:$0xf]
    %v258 = vld [vmem:[%s4 + $0x8] sm:$0xf]
    %v259 = vld [vmem:[%s4 + $0xc] sm:$0xf]
    %v260 = vld [vmem:[%s4 + $0x10] sm:$0xf]
    %v261 = vld [vmem:[%s4 + $0x14] sm:$0xf]
    %v262 = vld [vmem:[%s4 + $0x18] sm:$0xf]
    %v263 = vld [vmem:[%s4 + $0x1c] sm:$0xf]
    %v264 = vld [vmem:[%s4 + $0x20] sm:$0xf]
    %v265 = vld [vmem:[%s4 + $0x24] sm:$0xf]
    %v266 = vld [vmem:[%s4 + $0x28] sm:$0xf]
    %v267 = vld [vmem:[%s4 + $0x2c] sm:$0xf]
    %v268 = vld [vmem:[%s4 + $0x30] sm:$0xf]
    %v269 = vld [vmem:[%s4 + $0x34] sm:$0xf]
    %v270 = vld [vmem:[%s4 + $0x38] sm:$0xf]
    %v271 = vld [vmem:[%s4 + $0x3c] sm:$0xf]
    %v272 = vld [vmem:[%s4 + $0x40] sm:$0xf]
    %v273 = vld [vmem:[%s4 + $0x44] sm:$0xf]
    %v274 = vld [vmem:[%s4 + $0x48] sm:$0xf]
    %v275 = vld [vmem:[%s4 + $0x4c] sm:$0xf]
    %v276 = vld [vmem:[%s4 + $0x50] sm:$0xf]
    %v277 = vld [vmem:[%s4 + $0x54] sm:$0xf]
    %v278 = vld [vmem:[%s4 + $0x58] sm:$0xf]
    %v279 = vld [vmem:[%s4 + $0x5c] sm:$0xf]
    %v280 = vld [vmem:[%s4 + $0x60] sm:$0xf]
    %v281 = vld [vmem:[%s4 + $0x64] sm:$0xf]
    %v282 = vld [vmem:[%s4 + $0x68] sm:$0xf]
    %v283 = vld [vmem:[%s4 + $0x6c] sm:$0xf]
    %v284 = vld [vmem:[%s4 + $0x70] sm:$0xf]
    %v285 = vld [vmem:[%s4 + $0x74] sm:$0xf]
    %v286 = vld [vmem:[%s4 + $0x78] sm:$0xf]
    %v287 = vld [vmem:[%s4 + $0x7c] sm:$0xf]
    %v288 = vld [vmem:[%s5] sm:$0x1]
    %v290 = vlaneseq
    %v291 = vshrl.u32 %v290, 7
    %v292 = vsub.s32 0, %v291
    %v293 = vrot.slane %v288, %v292
    %v327 = vunpack.c.l.b16 %v256
    %v328 = vunpack.c.l.b16 %v257
    %v329 = vunpack.c.l.b16 %v258
    %v330 = vunpack.c.l.b16 %v259
    %v331 = vunpack.c.l.b16 %v260
    %v332 = vunpack.c.l.b16 %v261
    %v333 = vunpack.c.l.b16 %v262
    %v334 = vunpack.c.l.b16 %v263
    %v335 = vunpack.c.l.b16 %v264
    %v336 = vunpack.c.l.b16 %v265
    %v337 = vunpack.c.l.b16 %v266
    %v338 = vunpack.c.l.b16 %v267
    %v339 = vunpack.c.l.b16 %v268
    %v340 = vunpack.c.l.b16 %v269
    %v341 = vunpack.c.l.b16 %v270
    %v342 = vunpack.c.l.b16 %v271
    %v343 = vunpack.c.l.b16 %v272
    %v344 = vunpack.c.l.b16 %v273
    %v345 = vunpack.c.l.b16 %v274
    %v346 = vunpack.c.l.b16 %v275
    %v347 = vunpack.c.l.b16 %v276
    %v348 = vunpack.c.l.b16 %v277
    %v349 = vunpack.c.l.b16 %v278
    %v350 = vunpack.c.l.b16 %v279
    %v351 = vunpack.c.l.b16 %v280
    %v352 = vunpack.c.l.b16 %v281
    %v353 = vunpack.c.l.b16 %v282
    %v354 = vunpack.c.l.b16 %v283
    %v355 = vunpack.c.l.b16 %v284
    %v356 = vunpack.c.l.b16 %v285
    %v357 = vunpack.c.l.b16 %v286
    %v358 = vunpack.c.l.b16 %v287
    %v359 = vpack.c.b16 %v328, %v327
    %v360 = vpack.c.b16 %v330, %v329
    %v361 = vpack.c.b16 %v332, %v331
    %v362 = vpack.c.b16 %v334, %v333
    %v363 = vpack.c.b16 %v336, %v335
    %v364 = vpack.c.b16 %v338, %v337
    %v365 = vpack.c.b16 %v340, %v339
    %v366 = vpack.c.b16 %v342, %v341
    %v367 = vpack.c.b16 %v344, %v343
    %v368 = vpack.c.b16 %v346, %v345
    %v369 = vpack.c.b16 %v348, %v347
    %v370 = vpack.c.b16 %v350, %v349
    %v371 = vpack.c.b16 %v352, %v351
    %v372 = vpack.c.b16 %v354, %v353
    %v373 = vpack.c.b16 %v356, %v355
    %v374 = vpack.c.b16 %v358, %v357
    %391 = vmatprep.subr.bf16.mxu0 0
    %392 = vmatpush1.bf16.msra.mxu0 %v359
    %393 = vmatprep.subr.bf16.mxu0 0
    %394 = vmatpush1.bf16.msra.mxu0 %v360
    %395 = vmatprep.subr.bf16.mxu0 0
    %396 = vmatpush1.bf16.msra.mxu0 %v361
    %397 = vmatprep.subr.bf16.mxu0 0
    %398 = vmatpush1.bf16.msra.mxu0 %v362
    %399 = vmatprep.subr.bf16.mxu0 0
    %400 = vmatpush1.bf16.msra.mxu0 %v363
    %401 = vmatprep.subr.bf16.mxu0 0
    %402 = vmatpush1.bf16.msra.mxu0 %v364
    %403 = vmatprep.subr.bf16.mxu0 0
    %404 = vmatpush1.bf16.msra.mxu0 %v365
    %405 = vmatprep.subr.bf16.mxu0 0
    %406 = vmatpush1.bf16.msra.mxu0 %v366
    %407 = vmatprep.subr.bf16.mxu0 0
    %408 = vmatpush1.bf16.msra.mxu0 %v367
    %409 = vmatprep.subr.bf16.mxu0 0
    %410 = vmatpush1.bf16.msra.mxu0 %v368
    %411 = vmatprep.subr.bf16.mxu0 0
    %412 = vmatpush1.bf16.msra.mxu0 %v369
    %413 = vmatprep.subr.bf16.mxu0 0
    %414 = vmatpush1.bf16.msra.mxu0 %v370
    %415 = vmatprep.subr.bf16.mxu0 0
    %416 = vmatpush1.bf16.msra.mxu0 %v371
    %417 = vmatprep.subr.bf16.mxu0 0
    %418 = vmatpush1.bf16.msra.mxu0 %v372
    %419 = vmatprep.subr.bf16.mxu0 0
    %420 = vmatpush1.bf16.msra.mxu0 %v373
    %421 = vmatprep.subr.bf16.mxu0 0
    %422 = vmatpush1.bf16.msra.mxu0 %v374
    %423 = vmatprep.mubr.bf16.mxu0 %v255
    %424 = vmatmul.mubr.bf16.gmra.mrb[0].mxu0 %v254
    %v425 = vpop.f32.mrb[0].mxu0
    %v426 = vadd.f32 %v293, %v425
    %v427 = vpop.f32.mrb[0].mxu0
    %v428 = vpop.f32.mrb[0].mxu0
    %v429 = vpop.f32.mrb[0].mxu0
    %430 = vdwg.mxu0
    %431 = vst [vmem:[%s10] sm:$0xff] %v426
    %v432 = vld [vmem:[%s1] sm:$0xff]
    %v433 = vld [vmem:[%s6] sm:$0xff]
    %v434 = vld [vmem:[%s6 + $0x8] sm:$0xff]
    %v435 = vld [vmem:[%s6 + $0x10] sm:$0xff]
    %v436 = vld [vmem:[%s6 + $0x18] sm:$0xff]
    %v437 = vld [vmem:[%s6 + $0x20] sm:$0xff]
    %v438 = vld [vmem:[%s6 + $0x28] sm:$0xff]
    %v439 = vld [vmem:[%s6 + $0x30] sm:$0xff]
    %v440 = vld [vmem:[%s6 + $0x38] sm:$0xff]
    %v441 = vld [vmem:[%s7] sm:$0x3]
    %v443 = vlaneseq
    %v444 = vshrl.u32 %v443, 7
    %v445 = vsub.s32 0, %v444
    %v446 = vrot.slane %v441, %v445
    %v447 = vlaneseq
    %v448 = vshrl.u32 %v447, 7
    %v449 = vsub.s32 1, %v448
    %v450 = vrot.slane %v441, %v449
    %vm453 = vcmask 261120
    %v455 = vsel %vm453, %v432, 0
    %457 = vmatprep.subr.mxu0 %v434
    %458 = vmatpush1.msra.mxu0 %v433
    %459 = vmatprep.subr.mxu0 %v436
    %460 = vmatpush1.msra.mxu0 %v435
    %461 = vmatprep.subr.mxu0 %v438
    %462 = vmatpush1.msra.mxu0 %v437
    %463 = vmatprep.subr.mxu0 %v440
    %464 = vmatpush1.msra.mxu0 %v439
    %465 = vmatprep.subr.mxu0 0.0
    %466 = vmatpush1.msra.mxu0 0.0
    %467 = vmatprep.subr.mxu0 0.0
    %468 = vmatpush1.msra.mxu0 0.0
    %469 = vmatprep.subr.mxu0 0.0
    %470 = vmatpush1.msra.mxu0 0.0
    %471 = vmatprep.subr.mxu0 0.0
    %472 = vmatpush1.msra.mxu0 0.0
    %473 = vmatprep.subr.mxu0 0.0
    %474 = vmatpush1.msra.mxu0 0.0
    %475 = vmatprep.subr.mxu0 0.0
    %476 = vmatpush1.msra.mxu0 0.0
    %477 = vmatprep.subr.mxu0 0.0
    %478 = vmatpush1.msra.mxu0 0.0
    %479 = vmatprep.subr.mxu0 0.0
    %480 = vmatpush1.msra.mxu0 0.0
    %481 = vmatprep.subr.mxu0 0.0
    %482 = vmatpush1.msra.mxu0 0.0
    %483 = vmatprep.subr.mxu0 0.0
    %484 = vmatpush1.msra.mxu0 0.0
    %485 = vmatprep.subr.mxu0 0.0
    %486 = vmatpush1.msra.mxu0 0.0
    %487 = vmatprep.subr.mxu0 0.0
    %488 = vmatpush1.msra.mxu0 0.0
    %489 = vmatprep.subr.mxu0 0.0
    %490 = vmatpush1.msra.mxu0 0.0
    %491 = vmatprep.subr.mxu0 0.0
    %492 = vmatpush1.msra.mxu0 0.0
    %493 = vmatprep.subr.mxu0 0.0
    %494 = vmatpush1.msra.mxu0 0.0
    %495 = vmatprep.subr.mxu0 0.0
    %496 = vmatpush1.msra.mxu0 0.0
    %497 = vmatprep.subr.mxu0 0.0
    %498 = vmatpush1.msra.mxu0 0.0
    %499 = vmatprep.subr.mxu0 0.0
    %500 = vmatpush1.msra.mxu0 0.0
    %501 = vmatprep.subr.mxu0 0.0
    %502 = vmatpush1.msra.mxu0 0.0
    %503 = vmatprep.subr.mxu0 0.0
    %504 = vmatpush1.msra.mxu0 0.0
    %505 = vmatprep.subr.mxu0 0.0
    %506 = vmatpush1.msra.mxu0 0.0
    %507 = vmatprep.subr.mxu0 0.0
    %508 = vmatpush1.msra.mxu0 0.0
    %509 = vmatprep.subr.mxu0 0.0
    %510 = vmatpush1.msra.mxu0 0.0
    %511 = vmatprep.subr.mxu0 0.0
    %512 = vmatpush1.msra.mxu0 0.0
    %513 = vmatprep.subr.mxu0 0.0
    %514 = vmatpush1.msra.mxu0 0.0
    %515 = vmatprep.subr.mxu0 0.0
    %516 = vmatpush1.msra.mxu0 0.0
    %517 = vmatprep.subr.mxu0 0.0
    %518 = vmatpush1.msra.mxu0 0.0
    %519 = vmatprep.subr.mxu0 0.0
    %520 = vmatpush1.msra.mxu0 0.0
    %521 = vmatprep.mubr.f32.mxu0 0.0
    %522 = vmatmul.mubr.f32.gmra.mrb[0].mxu0 %v455
    %v523 = vpop.f32.mrb[0].mxu0
    %v524 = vadd.f32 %v446, %v523
    %v525 = vpop.f32.mrb[0].mxu0
    %v526 = vadd.f32 %v450, %v525
    %527 = vdwg.mxu0
    %v528 = vmul.f32 %v524, 0.2
    %v529 = vmul.f32 %v526, 0.2
    %v530 = vmax.f32 %v524, %v528
    %v531 = vmax.f32 %v526, %v529
    %v532 = vpack.c.bf16 %v530, %v530
    %v533 = vpack.c.bf16 %v531, %v531
    %v534 = vld [vmem:[%s8] sm:$0xf]
    %v535 = vld [vmem:[%s8 + $0x4] sm:$0xf]
    %v536 = vld [vmem:[%s8 + $0x8] sm:$0xf]
    %v537 = vld [vmem:[%s8 + $0xc] sm:$0xf]
    %v538 = vld [vmem:[%s8 + $0x10] sm:$0xf]
    %v539 = vld [vmem:[%s8 + $0x14] sm:$0xf]
    %v540 = vld [vmem:[%s8 + $0x18] sm:$0xf]
    %v541 = vld [vmem:[%s8 + $0x1c] sm:$0xf]
    %v542 = vld [vmem:[%s8 + $0x20] sm:$0xf]
    %v543 = vld [vmem:[%s8 + $0x24] sm:$0xf]
    %v544 = vld [vmem:[%s8 + $0x28] sm:$0xf]
    %v545 = vld [vmem:[%s8 + $0x2c] sm:$0xf]
    %v546 = vld [vmem:[%s8 + $0x30] sm:$0xf]
    %v547 = vld [vmem:[%s8 + $0x34] sm:$0xf]
    %v548 = vld [vmem:[%s8 + $0x38] sm:$0xf]
    %v549 = vld [vmem:[%s8 + $0x3c] sm:$0xf]
    %v550 = vld [vmem:[%s8 + $0x40] sm:$0xf]
    %v551 = vld [vmem:[%s8 + $0x44] sm:$0xf]
    %v552 = vld [vmem:[%s8 + $0x48] sm:$0xf]
    %v553 = vld [vmem:[%s8 + $0x4c] sm:$0xf]
    %v554 = vld [vmem:[%s8 + $0x50] sm:$0xf]
    %v555 = vld [vmem:[%s8 + $0x54] sm:$0xf]
    %v556 = vld [vmem:[%s8 + $0x58] sm:$0xf]
    %v557 = vld [vmem:[%s8 + $0x5c] sm:$0xf]
    %v558 = vld [vmem:[%s8 + $0x60] sm:$0xf]
    %v559 = vld [vmem:[%s8 + $0x64] sm:$0xf]
    %v560 = vld [vmem:[%s8 + $0x68] sm:$0xf]
    %v561 = vld [vmem:[%s8 + $0x6c] sm:$0xf]
    %v562 = vld [vmem:[%s8 + $0x70] sm:$0xf]
    %v563 = vld [vmem:[%s8 + $0x74] sm:$0xf]
    %v564 = vld [vmem:[%s8 + $0x78] sm:$0xf]
    %v565 = vld [vmem:[%s8 + $0x7c] sm:$0xf]
    %v566 = vld [vmem:[%s9] sm:$0x1]
    %v568 = vlaneseq
    %v569 = vshrl.u32 %v568, 7
    %v570 = vsub.s32 0, %v569
    %v571 = vrot.slane %v566, %v570
    %v605 = vunpack.c.l.b16 %v534
    %v606 = vunpack.c.l.b16 %v535
    %v607 = vunpack.c.l.b16 %v536
    %v608 = vunpack.c.l.b16 %v537
    %v609 = vunpack.c.l.b16 %v538
    %v610 = vunpack.c.l.b16 %v539
    %v611 = vunpack.c.l.b16 %v540
    %v612 = vunpack.c.l.b16 %v541
    %v613 = vunpack.c.l.b16 %v542
    %v614 = vunpack.c.l.b16 %v543
    %v615 = vunpack.c.l.b16 %v544
    %v616 = vunpack.c.l.b16 %v545
    %v617 = vunpack.c.l.b16 %v546
    %v618 = vunpack.c.l.b16 %v547
    %v619 = vunpack.c.l.b16 %v548
    %v620 = vunpack.c.l.b16 %v549
    %v621 = vunpack.c.l.b16 %v550
    %v622 = vunpack.c.l.b16 %v551
    %v623 = vunpack.c.l.b16 %v552
    %v624 = vunpack.c.l.b16 %v553
    %v625 = vunpack.c.l.b16 %v554
    %v626 = vunpack.c.l.b16 %v555
    %v627 = vunpack.c.l.b16 %v556
    %v628 = vunpack.c.l.b16 %v557
    %v629 = vunpack.c.l.b16 %v558
    %v630 = vunpack.c.l.b16 %v559
    %v631 = vunpack.c.l.b16 %v560
    %v632 = vunpack.c.l.b16 %v561
    %v633 = vunpack.c.l.b16 %v562
    %v634 = vunpack.c.l.b16 %v563
    %v635 = vunpack.c.l.b16 %v564
    %v636 = vunpack.c.l.b16 %v565
    %v637 = vpack.c.b16 %v606, %v605
    %v638 = vpack.c.b16 %v608, %v607
    %v639 = vpack.c.b16 %v610, %v609
    %v640 = vpack.c.b16 %v612, %v611
    %v641 = vpack.c.b16 %v614, %v613
    %v642 = vpack.c.b16 %v616, %v615
    %v643 = vpack.c.b16 %v618, %v617
    %v644 = vpack.c.b16 %v620, %v619
    %v645 = vpack.c.b16 %v622, %v621
    %v646 = vpack.c.b16 %v624, %v623
    %v647 = vpack.c.b16 %v626, %v625
    %v648 = vpack.c.b16 %v628, %v627
    %v649 = vpack.c.b16 %v630, %v629
    %v650 = vpack.c.b16 %v632, %v631
    %v651 = vpack.c.b16 %v634, %v633
    %v652 = vpack.c.b16 %v636, %v635
    %669 = vmatprep.subr.bf16.mxu0 0
    %670 = vmatpush1.bf16.msra.mxu0 %v637
    %671 = vmatprep.subr.bf16.mxu0 0
    %672 = vmatpush1.bf16.msra.mxu0 %v638
    %673 = vmatprep.subr.bf16.mxu0 0
    %674 = vmatpush1.bf16.msra.mxu0 %v639
    %675 = vmatprep.subr.bf16.mxu0 0
    %676 = vmatpush1.bf16.msra.mxu0 %v640
    %677 = vmatprep.subr.bf16.mxu0 0
    %678 = vmatpush1.bf16.msra.mxu0 %v641
    %679 = vmatprep.subr.bf16.mxu0 0
    %680 = vmatpush1.bf16.msra.mxu0 %v642
    %681 = vmatprep.subr.bf16.mxu0 0
    %682 = vmatpush1.bf16.msra.mxu0 %v643
    %683 = vmatprep.subr.bf16.mxu0 0
    %684 = vmatpush1.bf16.msra.mxu0 %v644
    %685 = vmatprep.subr.bf16.mxu0 0
    %686 = vmatpush1.bf16.msra.mxu0 %v645
    %687 = vmatprep.subr.bf16.mxu0 0
    %688 = vmatpush1.bf16.msra.mxu0 %v646
    %689 = vmatprep.subr.bf16.mxu0 0
    %690 = vmatpush1.bf16.msra.mxu0 %v647
    %691 = vmatprep.subr.bf16.mxu0 0
    %692 = vmatpush1.bf16.msra.mxu0 %v648
    %693 = vmatprep.subr.bf16.mxu0 0
    %694 = vmatpush1.bf16.msra.mxu0 %v649
    %695 = vmatprep.subr.bf16.mxu0 0
    %696 = vmatpush1.bf16.msra.mxu0 %v650
    %697 = vmatprep.subr.bf16.mxu0 0
    %698 = vmatpush1.bf16.msra.mxu0 %v651
    %699 = vmatprep.subr.bf16.mxu0 0
    %700 = vmatpush1.bf16.msra.mxu0 %v652
    %701 = vmatprep.mubr.bf16.mxu0 %v533
    %702 = vmatmul.mubr.bf16.gmra.mrb[0].mxu0 %v532
    %v703 = vpop.f32.mrb[0].mxu0
    %v704 = vadd.f32 %v571, %v703
    %v705 = vpop.f32.mrb[0].mxu0
    %v706 = vpop.f32.mrb[0].mxu0
    %v707 = vpop.f32.mrb[0].mxu0
    %708 = vdwg.mxu0
    %709 = vst [vmem:[%s10 + $0x8] sm:$0xff] %v704
  $region49: #{bow_model_forward.1} parent=0 // pred_fallthru
    _
  // Predicated region
  $region50: #{bow_model_forward.1} parent=0 // pred_check
    _
  $region51: #{bow_model_forward.1} parent=0 // pred_check_branch
    %711 = sbr.rel (0) target = $region53
  $region52: #{bow_model_forward.1} parent=0 // pred_region
    _
  $region53: #{bow_model_forward.1} parent=0 // pred_fallthru
    _
  // Predicated region
  $region54: #{bow_model_forward.1} parent=0 // pred_check
    _
  $region55: #{bow_model_forward.1} parent=0 // pred_check_branch
    %713 = sbr.rel (0) target = $region57
  $region56: #{bow_model_forward.1} parent=0 // pred_region
    _
  $region57: #{bow_model_forward.1} parent=0 // pred_fallthru
    _

</llo_original>
